<compile_context>
chip_gen: v5e
topology: v5e:2x2
jax: 0.10.0
libtpu: 0.0.40
codegen_flags: <defaults>
</compile_context>

<pallas_src>
import jax
import jax.numpy as jnp
import numpy as np
from jax import lax
from jax.experimental import pallas as pl
from jax.experimental.pallas import tpu as pltpu


def _round_up(x, m):
    return ((x + m - 1) // m) * m


def _mlp_kernel(x_ref, w1_ref, b1_ref, w2_ref, b2_ref, w3_ref, b3_ref, o_ref):
    # x arrives in its natural (batch_tile, n_in) layout; the transpose to the
    # feature-major form is fused into the first dot_general (both operands
    # contract on their minor axis), so the hidden activations are lane-dense
    # (features, batch) tiles and the wrapper never re-lays-out x.
    x_bf = x_ref[...].astype(jnp.bfloat16)                          # (bt, n_in)

    # Layer 1: h1[f, b] = sum_k w1t[f, k] * x[b, k]        -> (H, bt)
    h1 = lax.dot_general(
        w1_ref[...], x_bf,
        dimension_numbers=(((1,), (1,)), ((), ())),
        preferred_element_type=jnp.float32)
    h1 = jnp.maximum(h1 + b1_ref[...], 0.0).astype(jnp.bfloat16)

    # Layer 2: (H, H) @ (H, bt)                            -> (H, bt)
    h2 = jnp.dot(w2_ref[...], h1, preferred_element_type=jnp.float32)
    h2 = jnp.maximum(h2 + b2_ref[...], 0.0).astype(jnp.bfloat16)

    # Layer 3: out[b, o] = sum_f h2[f, b] * w3[f, o]       -> (bt, n_out)
    # Contracting both operands on their major axis yields the batch-major
    # result directly, so the output is stored in the PyTorch (B, n_out)
    # layout with no wrapper-side transpose of the result.
    out = lax.dot_general(
        h2, w3_ref[...],
        dimension_numbers=(((0,), (0,)), ((), ())),
        preferred_element_type=jnp.float32)
    # TODO(synk): a bf16 bias/store epilogue would cut VALU + write bytes on v6e/v7x
    # (not v5e); kept f32 here to preserve the module's float32 output semantics.
    o_ref[...] = (out + b3_ref[...]).astype(o_ref.dtype)


def pack_params(params):
    """Pack parameters once for the kernel.

    Layers 1-2 weights are transposed to (out, in); the hidden dim is zero-padded to a
    multiple of 8 (exact through linear + ReLU).  Layer-3 weight stays in its natural
    (in, out) orientation so the kernel's final contraction produces a batch-major
    result.  Matmul operands are bf16; biases stay f32 ((H, 1) columns broadcast over
    the batch lanes, (1, n_out) row broadcasts over batch sublanes)."""
    n_in = params["w1"].shape[0]
    hidden = params["w1"].shape[1]
    n_out2 = params["w3"].shape[1]
    h_pad = _round_up(hidden, 8)

    def pad_to(a, shape):
        return jnp.pad(a, [(0, s - d) for s, d in zip(shape, a.shape)])

    return {
        "w1t": pad_to(jnp.transpose(params["w1"]), (h_pad, n_in)).astype(jnp.bfloat16),
        "b1c": pad_to(jnp.transpose(params["b1"]), (h_pad, 1)).astype(jnp.float32),
        "w2t": pad_to(jnp.transpose(params["w2"]), (h_pad, h_pad)).astype(jnp.bfloat16),
        "b2c": pad_to(jnp.transpose(params["b2"]), (h_pad, 1)).astype(jnp.float32),
        "w3n": pad_to(params["w3"], (h_pad, n_out2)).astype(jnp.bfloat16),
        "b3r": params["b3"].astype(jnp.float32),     # (1, n_out2) row
    }


def _pick_batch_tile(B, max_tile=32768):
    """Pick (batch_tile, num_tiles). Big tiles amortize the ~0.35 us/grid-step
    overhead; the cap keeps double-buffered x/out tiles (~6 MiB at 32768 lanes)
    under v5e's 16 MiB default scoped VMEM. When the batch allows it, force
    >= 2 grid steps so both v7x TensorCores pick up work."""
    if B <= 256:
        return B, 1                               # single full-array block (always legal)
    b_pad = _round_up(B, 128)
    tile = min(max_tile, b_pad)
    if b_pad // tile < 2:
        tile = _round_up(b_pad // 2, 128)         # split into (at least) two steps
    tile = min(tile, (B // 128) * 128)            # block never exceeds the array
    return tile, -(-B // tile)


@jax.jit
def general_nn_forward(x, packed):
    """x: (B, n_in) float32 -> (B, n_out_total) float32 (PyTorch layout both ends)."""
    B, n_in = x.shape
    w1t, b1c = packed["w1t"], packed["b1c"]
    w2t, b2c = packed["w2t"], packed["b2c"]
    w3n, b3r = packed["w3n"], packed["b3r"]
    n_out_total = w3n.shape[1]

    batch_tile, num_tiles = _pick_batch_tile(B)

    # Weights/biases: constant block index -> DMA'd once, resident in VMEM.
    resident = lambda a: pl.BlockSpec(a.shape, lambda i: (0, 0))

    return pl.pallas_call(
        _mlp_kernel,
        out_shape=jax.ShapeDtypeStruct((B, n_out_total), jnp.float32),
        grid=(num_tiles,),
        in_specs=[
            pl.BlockSpec((batch_tile, n_in), lambda i: (i, 0)),   # x streamed per tile
            resident(w1t), resident(b1c),
            resident(w2t), resident(b2c),
            resident(w3n), resident(b3r),
        ],
        out_specs=pl.BlockSpec((batch_tile, n_out_total), lambda i: (i, 0)),
        compiler_params=pltpu.CompilerParams(
            dimension_semantics=("parallel",),    # shard batch tiles across TCs (v7x)
        ),
    )(x, w1t, b1c, w2t, b2c, w3n, b3r)


def init_params(key, n_in, hidden_w, n_out_total):
    """Deterministic init mimicking torch.nn.Linear default (U(-1/sqrt(fan_in), ...)).
    Logical layout: w (in, out) so y = x @ w + b, b as (1, out)."""
    def linear(k, fan_in, fan_out):
        kw, kb = jax.random.split(k)
        bound = 1.0 / np.sqrt(fan_in)
        w = jax.random.uniform(kw, (fan_in, fan_out), jnp.float32, -bound, bound)
        b = jax.random.uniform(kb, (1, fan_out), jnp.float32, -bound, bound)
        return w, b

    k1, k2, k3 = jax.random.split(key, 3)
    w1, b1 = linear(k1, n_in, hidden_w)
    w2, b2 = linear(k2, hidden_w, hidden_w)
    w3, b3 = linear(k3, hidden_w, n_out_total)
    return {"w1": w1, "b1": b1, "w2": w2, "b2": b2, "w3": w3, "b3": b3}


def reference_forward(x, params):
    """Plain-JAX reference with the same bf16-operand / f32-accumulate math."""
    bf = lambda a: a.astype(jnp.bfloat16)
    h1 = jnp.dot(bf(x), bf(params["w1"]), preferred_element_type=jnp.float32)
    h1 = jnp.maximum(h1 + params["b1"], 0.0)
    h2 = jnp.dot(bf(h1), bf(params["w2"]), preferred_element_type=jnp.float32)
    h2 = jnp.maximum(h2 + params["b2"], 0.0)
    out = jnp.dot(bf(h2), bf(params["w3"]), preferred_element_type=jnp.float32)
    return out + params["b3"]


if __name__ == "__main__":
    # Module hyperparameters (small, consistent with GeneralNN defaults):
    n_in_input = 4         # e.g. motor commands
    n_in_state = 8         # state dims used
    n_in = n_in_input + n_in_state          # 12
    n_out = 6
    prob = True
    hidden_w = 32
    n_out_total = n_out * 2 if prob else n_out   # prob=True -> 12 outputs

    key = jax.random.PRNGKey(0)
    kx, kp, kx2 = jax.random.split(key, 3)
    params = init_params(kp, n_in, hidden_w, n_out_total)
    packed = pack_params(params)      # pack once (transpose / pad / bf16 weights)

    # Small batch: single full-array block, grid=(1,).
    x = jax.random.normal(kx, (8, n_in), dtype=jnp.float32)
    out = jax.block_until_ready(general_nn_forward(x, packed))
    np.testing.assert_allclose(np.asarray(out),
                               np.asarray(reference_forward(x, params)),
                               rtol=1e-3, atol=1e-3)
    assert out.shape == (8, n_out_total)

    # Larger batch: exercises the multi-tile "parallel" grid path (2 exact tiles).
    x2 = jax.random.normal(kx2, (512, n_in), dtype=jnp.float32)
    out2 = jax.block_until_ready(general_nn_forward(x2, packed))
    np.testing.assert_allclose(np.asarray(out2),
                               np.asarray(reference_forward(x2, params)),
                               rtol=1e-3, atol=1e-3)
    assert out2.shape == (512, n_out_total)

    # TODO(synk): preprocess/postprocess (sklearn scalers), angle transforms and the
    # training loop are host-side utilities of the PyTorch class, not part of forward().
    print("KERNEL_OK")
</pallas_src>

<mosaic_0001>
module attributes {stable_mosaic.version = 11 : i64} {
  func.func @_mlp_kernel(%arg0: i32, %arg1: memref<8x12xf32, #tpu.memory_space<vmem>>, %arg2: memref<32x12xbf16, #tpu.memory_space<vmem>>, %arg3: memref<32x1xf32, #tpu.memory_space<vmem>>, %arg4: memref<32x32xbf16, #tpu.memory_space<vmem>>, %arg5: memref<32x1xf32, #tpu.memory_space<vmem>>, %arg6: memref<32x12xbf16, #tpu.memory_space<vmem>>, %arg7: memref<1x12xf32, #tpu.memory_space<vmem>>, %arg8: memref<8x12xf32, #tpu.memory_space<vmem>>) attributes {dimension_semantics = [#tpu.dimension_semantics<parallel>], iteration_bounds = array<i64: 1>, scalar_prefetch = 0 : i64, scratch_operands = 0 : i64, tpu.core_type = #tpu.core_type<tc>, window_params = [{transform_indices = @transform_0, window_bounds = array<i64: 8, 12>}, {pipeline_mode = #tpu.pipeline_mode<synchronous>, transform_indices = @transform_1, window_bounds = array<i64: 32, 12>}, {pipeline_mode = #tpu.pipeline_mode<synchronous>, transform_indices = @transform_2, window_bounds = array<i64: 32, 1>}, {pipeline_mode = #tpu.pipeline_mode<synchronous>, transform_indices = @transform_3, window_bounds = array<i64: 32, 32>}, {pipeline_mode = #tpu.pipeline_mode<synchronous>, transform_indices = @transform_4, window_bounds = array<i64: 32, 1>}, {pipeline_mode = #tpu.pipeline_mode<synchronous>, transform_indices = @transform_5, window_bounds = array<i64: 32, 12>}, {pipeline_mode = #tpu.pipeline_mode<synchronous>, transform_indices = @transform_6, window_bounds = array<i64: 1, 12>}, {transform_indices = @transform_7, window_bounds = array<i64: 8, 12>}]} {
    %c0 = arith.constant 0 : index
    %c0_0 = arith.constant 0 : index
    %0 = vector.load %arg1[%c0, %c0_0] : memref<8x12xf32, #tpu.memory_space<vmem>>, vector<8x12xf32>
    %1 = arith.truncf %0 : vector<8x12xf32> to vector<8x12xbf16>
    %c0_1 = arith.constant 0 : index
    %c0_2 = arith.constant 0 : index
    %2 = vector.load %arg2[%c0_1, %c0_2] : memref<32x12xbf16, #tpu.memory_space<vmem>>, vector<32x12xbf16>
    %cst = arith.constant dense<0.000000e+00> : vector<32x8xf32>
    %3 = tpu.matmul %2, %1, %cst {dimension_numbers = #tpu.dot_dimension_numbers<[1], [1], [0], [0], [0, 0, 1, 0], [], []>} : vector<32x12xbf16>, vector<8x12xbf16>, vector<32x8xf32> -> vector<32x8xf32>
    %c0_3 = arith.constant 0 : index
    %c0_4 = arith.constant 0 : index
    %4 = vector.load %arg3[%c0_3, %c0_4] : memref<32x1xf32, #tpu.memory_space<vmem>>, vector<32x1xf32>
    %5 = vector.broadcast %4 : vector<32x1xf32> to vector<32x8xf32>
    %6 = arith.addf %3, %5 : vector<32x8xf32>
    %cst_5 = arith.constant 0.000000e+00 : f32
    %7 = vector.broadcast %cst_5 : f32 to vector<32x8xf32>
    %8 = arith.maximumf %6, %7 : vector<32x8xf32>
    %9 = arith.truncf %8 : vector<32x8xf32> to vector<32x8xbf16>
    %c0_6 = arith.constant 0 : index
    %c0_7 = arith.constant 0 : index
    %10 = vector.load %arg4[%c0_6, %c0_7] : memref<32x32xbf16, #tpu.memory_space<vmem>>, vector<32x32xbf16>
    %cst_8 = arith.constant dense<0.000000e+00> : vector<32x8xf32>
    %11 = tpu.matmul %10, %9, %cst_8 {dimension_numbers = #tpu.dot_dimension_numbers<[1], [0], [0], [1], [0, 0, 1, 1], [], []>} : vector<32x32xbf16>, vector<32x8xbf16>, vector<32x8xf32> -> vector<32x8xf32>
    %c0_9 = arith.constant 0 : index
    %c0_10 = arith.constant 0 : index
    %12 = vector.load %arg5[%c0_9, %c0_10] : memref<32x1xf32, #tpu.memory_space<vmem>>, vector<32x1xf32>
    %13 = vector.broadcast %12 : vector<32x1xf32> to vector<32x8xf32>
    %14 = arith.addf %11, %13 : vector<32x8xf32>
    %cst_11 = arith.constant 0.000000e+00 : f32
    %15 = vector.broadcast %cst_11 : f32 to vector<32x8xf32>
    %16 = arith.maximumf %14, %15 : vector<32x8xf32>
    %17 = arith.truncf %16 : vector<32x8xf32> to vector<32x8xbf16>
    %c0_12 = arith.constant 0 : index
    %c0_13 = arith.constant 0 : index
    %18 = vector.load %arg6[%c0_12, %c0_13] : memref<32x12xbf16, #tpu.memory_space<vmem>>, vector<32x12xbf16>
    %cst_14 = arith.constant dense<0.000000e+00> : vector<8x12xf32>
    %19 = tpu.matmul %17, %18, %cst_14 {dimension_numbers = #tpu.dot_dimension_numbers<[0], [0], [1], [1], [0, 1, 1, 1], [], []>} : vector<32x8xbf16>, vector<32x12xbf16>, vector<8x12xf32> -> vector<8x12xf32>
    %c0_15 = arith.constant 0 : index
    %c0_16 = arith.constant 0 : index
    %20 = vector.load %arg7[%c0_15, %c0_16] : memref<1x12xf32, #tpu.memory_space<vmem>>, vector<1x12xf32>
    %21 = vector.broadcast %20 : vector<1x12xf32> to vector<8x12xf32>
    %22 = arith.addf %19, %21 : vector<8x12xf32>
    %c0_17 = arith.constant 0 : index
    %c0_18 = arith.constant 0 : index
    %23 = vector.load %arg8[%c0_17, %c0_18] : memref<8x12xf32, #tpu.memory_space<vmem>>, vector<8x12xf32>
    tpu.vector_store %arg8[%c0_17, %c0_18], %22 {strides = array<i32>} : memref<8x12xf32, #tpu.memory_space<vmem>>, vector<8x12xf32>,
    return
  }
  func.func @transform_0(%arg0: i32) -> (i32, i32) {
    %c0_i32 = arith.constant 0 : i32
    %c0_i32_0 = arith.constant 0 : i32
    return %arg0, %c0_i32 : i32, i32
  }
  func.func @transform_1(%arg0: i32) -> (i32, i32) {
    %c0_i32 = arith.constant 0 : i32
    %c0_i32_0 = arith.constant 0 : i32
    %c0_i32_1 = arith.constant 0 : i32
    return %c0_i32, %c0_i32_0 : i32, i32
  }
  func.func @transform_2(%arg0: i32) -> (i32, i32) {
    %c0_i32 = arith.constant 0 : i32
    %c0_i32_0 = arith.constant 0 : i32
    %c0_i32_1 = arith.constant 0 : i32
    return %c0_i32, %c0_i32_0 : i32, i32
  }
  func.func @transform_3(%arg0: i32) -> (i32, i32) {
    %c0_i32 = arith.constant 0 : i32
    %c0_i32_0 = arith.constant 0 : i32
    %c0_i32_1 = arith.constant 0 : i32
    return %c0_i32, %c0_i32_0 : i32, i32
  }
  func.func @transform_4(%arg0: i32) -> (i32, i32) {
    %c0_i32 = arith.constant 0 : i32
    %c0_i32_0 = arith.constant 0 : i32
    %c0_i32_1 = arith.constant 0 : i32
    return %c0_i32, %c0_i32_0 : i32, i32
  }
  func.func @transform_5(%arg0: i32) -> (i32, i32) {
    %c0_i32 = arith.constant 0 : i32
    %c0_i32_0 = arith.constant 0 : i32
    %c0_i32_1 = arith.constant 0 : i32
    return %c0_i32, %c0_i32_0 : i32, i32
  }
  func.func @transform_6(%arg0: i32) -> (i32, i32) {
    %c0_i32 = arith.constant 0 : i32
    %c0_i32_0 = arith.constant 0 : i32
    %c0_i32_1 = arith.constant 0 : i32
    return %c0_i32, %c0_i32_0 : i32, i32
  }
  func.func @transform_7(%arg0: i32) -> (i32, i32) {
    %c0_i32 = arith.constant 0 : i32
    %c0_i32_0 = arith.constant 0 : i32
    return %arg0, %c0_i32 : i32, i32
  }
}

</mosaic_0001>

<llo_original>
// kernel: general_nn_forward.1
$region0: #{general_nn_forward.1}
  #allocation0 [shape = 'u32[]', space=smem, size = 0x4, offset = 0x4, fixed_abs, tag = 'smem constant byte address 0x4 - core index']
  #allocation1 [shape = 'u32[72,128]{1,0:T(1,128)}', space=vmem, size = 0x9000, scoped, tag = 'internal scratch']
  %s0 = inlined_call_operand.vmem [shape: f32[8,12], index: 0, kind: input, shape index: {}]
  %s1 = inlined_call_operand.vmem [shape: bf16[32,12], index: 1, kind: input, shape index: {}]
  %s2 = inlined_call_operand.vmem [shape: f32[32,1], index: 2, kind: input, shape index: {}]
  %s3 = inlined_call_operand.vmem [shape: bf16[32,32], index: 3, kind: input, shape index: {}]
  %s4 = inlined_call_operand.vmem [shape: f32[32,1], index: 4, kind: input, shape index: {}]
  %s5 = inlined_call_operand.vmem [shape: bf16[32,12], index: 5, kind: input, shape index: {}]
  %s6 = inlined_call_operand.vmem [shape: f32[1,12], index: 6, kind: input, shape index: {}]
  %s7 = inlined_call_operand.hbm [shape: f32[8,12], index: 7, kind: output, shape index: {}]
  %s8 = sld [smem:[#allocation0]]
  $region38: #{general_nn_forward.1} parent=0
    _
  %s10 = ssub.s32 1, %s8
  %s11 = scalar_select 0, %s10, %s8
  $region1: #{general_nn_forward.1} parent=0
    #allocation2 [shape = 'u8[4096]{0}', space=vmem, size = 0x1000, scoped, tag = 'output window, operand 0, single buffered']
    #allocation3 [shape = 's32[1]{0}', space=sflag, size = 0x4, scoped, tag = 'scoped memory for general_nn_forward.1']
    %12 = vsyncpa [#allocation3], 0
    // Predicated region
    $region2: #{general_nn_forward.1} parent=1 // pred_check
      _
    $region3: #{general_nn_forward.1} parent=1 // pred_check_branch
      %14 = sbr.rel (0) target = $region5
    $region4: #{general_nn_forward.1} parent=1 // pred_region
      _
    $region5: #{general_nn_forward.1} parent=1 // pred_fallthru
      _
    // Predicated region
    $region6: #{general_nn_forward.1} parent=1 // pred_check
      _
    $region7: #{general_nn_forward.1} parent=1 // pred_check_branch
      %16 = sbr.rel (0) target = $region9
    $region8: #{general_nn_forward.1} parent=1 // pred_region
      _
    $region9: #{general_nn_forward.1} parent=1 // pred_fallthru
      _
    // Predicated region
    $region10: #{general_nn_forward.1} parent=1 // pred_check
      _
    $region11: #{general_nn_forward.1} parent=1 // pred_check_branch
      %18 = sbr.rel (0) target = $region13
    $region12: #{general_nn_forward.1} parent=1 // pred_region
      _
    $region13: #{general_nn_forward.1} parent=1 // pred_fallthru
      _
    // Predicated region
    $region14: #{general_nn_forward.1} parent=1 // pred_check
      _
    $region15: #{general_nn_forward.1} parent=1 // pred_check_branch
      %20 = sbr.rel (0) target = $region17
    $region16: #{general_nn_forward.1} parent=1 // pred_region
      _
    $region17: #{general_nn_forward.1} parent=1 // pred_fallthru
      _
    // Predicated region
    $region18: #{general_nn_forward.1} parent=1 // pred_check
      _
    $region19: #{general_nn_forward.1} parent=1 // pred_check_branch
      %22 = sbr.rel (0) target = $region21
    $region20: #{general_nn_forward.1} parent=1 // pred_region
      _
    $region21: #{general_nn_forward.1} parent=1 // pred_fallthru
      _
    // Predicated region
    $region22: #{general_nn_forward.1} parent=1 // pred_check
      _
    $region23: #{general_nn_forward.1} parent=1 // pred_check_branch
      %24 = sbr.rel (0) target = $region25
    $region24: #{general_nn_forward.1} parent=1 // pred_region
      _
    $region25: #{general_nn_forward.1} parent=1 // pred_fallthru
      _
    // Predicated region
    $region26: #{general_nn_forward.1} parent=1 // pred_check
      _
    $region27: #{general_nn_forward.1} parent=1 // pred_check_branch
      %26 = sbr.rel (0) target = $region29
    $region28: #{general_nn_forward.1} parent=1 // pred_region
      _
    $region29: #{general_nn_forward.1} parent=1 // pred_fallthru
      _
    %v28 = vld [vmem:[%s0] sm:$0xff]
    %v29 = vpack.c.bf16 %v28, %v28
    %v30 = vld [vmem:[%s1] sm:$0xf]
    %v31 = vld [vmem:[%s1 + $0x4] sm:$0xf]
    %v32 = vld [vmem:[%s1 + $0x8] sm:$0xf]
    %v33 = vld [vmem:[%s1 + $0xc] sm:$0xf]
    %v34 = vld [vmem:[%s2] sm:$0xff]
    %v35 = vld [vmem:[%s2 + $0x8] sm:$0xff]
    %v36 = vld [vmem:[%s2 + $0x10] sm:$0xff]
    %v37 = vld [vmem:[%s2 + $0x18] sm:$0xff]
    %39 = vset.pattern.permute.xlu0 0
    %40 = vperm.xlu0 %39, %v34
    %v41 = vpop.permute.xlu0 %40
    %44 = vset.pattern.permute.xlu0 0
    %45 = vperm.xlu0 %44, %v35
    %v46 = vpop.permute.xlu0 %45
    %49 = vset.pattern.permute.xlu0 0
    %50 = vperm.xlu0 %49, %v36
    %v51 = vpop.permute.xlu0 %50
    %54 = vset.pattern.permute.xlu0 0
    %55 = vperm.xlu0 %54, %v37
    %v56 = vpop.permute.xlu0 %55
    %v62 = vunpack.c.l.b16 %v30
    %v63 = vunpack.c.l.b16 %v31
    %v64 = vunpack.c.l.b16 %v32
    %v65 = vunpack.c.l.b16 %v33
    %v66 = vpack.c.b16 %v63, %v62
    %v67 = vpack.c.b16 %v65, %v64
    %vm68 = vcmask 97280
    %v70 = vsel %vm68, %v66, 0
    %v73 = vsel %vm68, %v67, 0
    %v76 = vsel %vm68, %v29, 0
    %78 = vmatpush.bf16.xpose.msra.mxu0 0
    %79 = vmatpush.bf16.xpose.msra.mxu0 0
    %80 = vmatpush.bf16.xpose.msra.mxu0 0
    %81 = vmatpush.bf16.xpose.msra.mxu0 0
    %82 = vmatpush.bf16.xpose.msra.mxu0 0
    %83 = vmatpush.bf16.xpose.msra.mxu0 0
    %84 = vmatpush.bf16.xpose.msra.mxu0 0
    %85 = vmatpush.bf16.xpose.msra.mxu0 %v76
    %86 = vmatmul.bf16.gmra.mxu0 %v70
    %v87 = vpop.f32.mrf.mxu0
    %v88 = vadd.f32 %v41, %v87
    %v89 = vpop.f32.mrf.mxu0
    %v90 = vadd.f32 %v46, %v89
    %91 = vmatmul.bf16.gmra.mxu0 %v73
    %v92 = vpop.f32.mrf.mxu0
    %v93 = vadd.f32 %v51, %v92
    %v94 = vpop.f32.mrf.mxu0
    %v95 = vadd.f32 %v56, %v94
    %96 = vdwg.mxu0
    %v97 = vmax.f32 %v88, 0.0
    %v98 = vmax.f32 %v90, 0.0
    %v99 = vmax.f32 %v93, 0.0
    %v100 = vmax.f32 %v95, 0.0
    %v101 = vpack.c.bf16 %v98, %v97
    %v102 = vpack.c.bf16 %v100, %v99
    %v103 = vld [vmem:[%s3] sm:$0xf]
    %v104 = vld [vmem:[%s3 + $0x4] sm:$0xf]
    %v105 = vld [vmem:[%s3 + $0x8] sm:$0xf]
    %v106 = vld [vmem:[%s3 + $0xc] sm:$0xf]
    %v107 = vld [vmem:[%s4] sm:$0xff]
    %v108 = vld [vmem:[%s4 + $0x8] sm:$0xff]
    %v109 = vld [vmem:[%s4 + $0x10] sm:$0xff]
    %v110 = vld [vmem:[%s4 + $0x18] sm:$0xff]
    %112 = vset.pattern.permute.xlu0 0
    %113 = vperm.xlu0 %112, %v107
    %v114 = vpop.permute.xlu0 %113
    %117 = vset.pattern.permute.xlu0 0
    %118 = vperm.xlu0 %117, %v108
    %v119 = vpop.permute.xlu0 %118
    %122 = vset.pattern.permute.xlu0 0
    %123 = vperm.xlu0 %122, %v109
    %v124 = vpop.permute.xlu0 %123
    %127 = vset.pattern.permute.xlu0 0
    %128 = vperm.xlu0 %127, %v110
    %v129 = vpop.permute.xlu0 %128
    %v135 = vunpack.c.l.b16 %v103
    %v136 = vunpack.c.l.b16 %v104
    %v137 = vunpack.c.l.b16 %v105
    %v138 = vunpack.c.l.b16 %v106
    %v139 = vpack.c.b16 %v136, %v135
    %v140 = vpack.c.b16 %v138, %v137
    %vm141 = vcmask 261120
    %v143 = vsel %vm141, %v139, 0
    %v146 = vsel %vm141, %v140, 0
    %148 = vmatpush.bf16.msra.mxu0 0
    %149 = vmatpush.bf16.msra.mxu0 0
    %150 = vmatpush.bf16.msra.mxu0 0
    %151 = vmatpush.bf16.msra.mxu0 0
    %152 = vmatpush.bf16.msra.mxu0 0
    %153 = vmatpush.bf16.msra.mxu0 0
    %154 = vmatpush.bf16.msra.mxu0 %v102
    %155 = vmatpush.bf16.msra.mxu0 %v101
    %156 = vmatmul.bf16.gmra.mxu0 %v143
    %v157 = vpop.f32.mrf.mxu0
    %v158 = vadd.f32 %v114, %v157
    %v159 = vpop.f32.mrf.mxu0
    %v160 = vadd.f32 %v119, %v159
    %161 = vmatmul.bf16.gmra.mxu0 %v146
    %v162 = vpop.f32.mrf.mxu0
    %v163 = vadd.f32 %v124, %v162
    %v164 = vpop.f32.mrf.mxu0
    %v165 = vadd.f32 %v129, %v164
    %166 = vdwg.mxu0
    %v167 = vmax.f32 %v158, 0.0
    %v168 = vmax.f32 %v160, 0.0
    %v169 = vmax.f32 %v163, 0.0
    %v170 = vmax.f32 %v165, 0.0
    %v171 = vpack.c.bf16 %v168, %v167
    %v172 = vpack.c.bf16 %v170, %v169
    %v173 = vld [vmem:[%s5] sm:$0xf]
    %v174 = vld [vmem:[%s5 + $0x4] sm:$0xf]
    %v175 = vld [vmem:[%s5 + $0x8] sm:$0xf]
    %v176 = vld [vmem:[%s5 + $0xc] sm:$0xf]
    %v177 = vld [vmem:[%s6] sm:$0x1]
    %v179 = vperm.slane %v177, 0
    %181 = vxpose.xlu0.c.b16.start [1/8] %v171, 128
    %182 = vxpose.xlu0.c.b16.cont [2/8] %v172, 128
    %183 = vxpose.xlu0.c.b16.cont [3/8] 0, 128
    %184 = vxpose.xlu0.c.b16.cont [4/8] 0, 128
    %185 = vxpose.xlu0.c.b16.cont [5/8] 0, 128
    %186 = vxpose.xlu0.c.b16.cont [6/8] 0, 128
    %187 = vxpose.xlu0.c.b16.cont [7/8] 0, 128
    %188 = vxpose.xlu0.c.b16.end [8/8] 0, 128
    %v189 = vpop.trf.xlu0
    %v190 = vpop.trf.xlu0
    %v191 = vpop.trf.xlu0
    %v192 = vpop.trf.xlu0
    %v193 = vpop.trf.xlu0
    %v194 = vpop.trf.xlu0
    %v195 = vpop.trf.xlu0
    %v196 = vpop.trf.xlu0
    %v201 = vunpack.c.l.b16 %v173
    %v202 = vunpack.c.l.b16 %v174
    %v203 = vunpack.c.l.b16 %v175
    %v204 = vunpack.c.l.b16 %v176
    %v205 = vpack.c.b16 %v202, %v201
    %v206 = vpack.c.b16 %v204, %v203
    %v210 = vsel %vm141, %v189, 0
    %212 = vmatpush.bf16.msra.mxu0 0
    %213 = vmatpush.bf16.msra.mxu0 0
    %214 = vmatpush.bf16.msra.mxu0 0
    %215 = vmatpush.bf16.msra.mxu0 0
    %216 = vmatpush.bf16.msra.mxu0 0
    %217 = vmatpush.bf16.msra.mxu0 0
    %218 = vmatpush.bf16.msra.mxu0 %v206
    %219 = vmatpush.bf16.msra.mxu0 %v205
    %220 = vmatmul.bf16.gmra.mxu0 %v210
    %v221 = vpop.f32.mrf.mxu0
    %v222 = vadd.f32 %v179, %v221
    %v223 = vpop.f32.mrf.mxu0
    %224 = vdwg.mxu0
    %225 = vst.msk [vmem:[#allocation2] sm:$0xff] %vm68, %v222
    // Predicated region
    $region30: #{general_nn_forward.1} parent=1 // pred_check
      _
    $region31: #{general_nn_forward.1} parent=1 // pred_check_branch
      %227 = sbr.rel (0) target = $region33
    $region32: #{general_nn_forward.1} parent=1 // pred_region
      %229 = vsyncadd [#allocation3], 0
      %s231 = sshll.u32 [#allocation2], 4
      %s232 = int_to_ptr.vmem [resolvable:$true] %s231
      %s233 = sshll.u32 %s7, 4
      %s234 = int_to_ptr.hbm [resolvable:$true] %s233
      %236 = dma.vmem_to_hbm [thread:$0]  %s232, 128, %s234, [#allocation3]
    $region33: #{general_nn_forward.1} parent=1 // pred_fallthru
      _
    // Predicated region
    $region34: #{general_nn_forward.1} parent=1 // pred_check
      _
    $region35: #{general_nn_forward.1} parent=1 // pred_check_branch
      %238 = sbr.rel (0) target = $region37
    $region36: #{general_nn_forward.1} parent=1 // pred_region
      %240 = dma.done [#allocation3], 128
    $region37: #{general_nn_forward.1} parent=1 // pred_fallthru
      _
    %241 = vsyncpa [#allocation3], 1

</llo_original>
